<compile_context>
chip_gen: v5e
topology: v5e:2x2
jax: 0.10.0
libtpu: 0.0.40
codegen_flags: <defaults>
</compile_context>

<pallas_src>
import math

import jax
import jax.numpy as jnp
from jax.experimental import pallas as pl
from jax.experimental.pallas import tpu as pltpu

# ---- synthetic "config" implied by the module's forward ----
BATCH = 2
SEQ = 8
HIDDEN = 32
INTERMEDIATE = 128          # 4x hidden, exactly one 128-lane vreg wide
LAYER_NORM_EPS = 1e-12
# hidden_dropout_prob -> nn.Dropout is identity at inference; omitted.

_SQRT_HALF = 1.0 / math.sqrt(2.0)

# f32 erf via the Eigen/XLA rational approximation (same one XLA lowers
# erf to for f32), erf(x) ~= x * P(x^2) / Q(x^2) with |x| clamped.
# TODO(synk): lax.erf has no Mosaic lowering rule; this in-kernel polynomial
# matches XLA's own f32 erf to ~1 ulp (modulo the approx EUP reciprocal).
_ERF_CLAMP = 3.832506856900711
_ERF_ALPHA = (
    -2.72614225801306e-10, 2.77068142495902e-08, -2.10102402082508e-06,
    -5.69250639462346e-05, -7.34990630326855e-04, -2.95459980854025e-03,
    -1.60960333262415e-02,
)
_ERF_BETA = (
    -1.45660718464996e-05, -2.13374055278905e-04, -1.68282697438203e-03,
    -7.37332916720468e-03, -1.42647390514189e-02,
)


def _erf_f32(x):
    x = jnp.maximum(jnp.minimum(x, jnp.float32(_ERF_CLAMP)),
                    jnp.float32(-_ERF_CLAMP))
    x2 = x * x
    p = jnp.float32(_ERF_ALPHA[0])
    for c in _ERF_ALPHA[1:]:
        p = p * x2 + jnp.float32(c)
    q = jnp.float32(_ERF_BETA[0])
    for c in _ERF_BETA[1:]:
        q = q * x2 + jnp.float32(c)
    # Divide -> EUP (approx reciprocal); VALU only carries the mul-adds.
    return (x * p) * pl.reciprocal(q, approx=True)


def _gelu_exact(x):
    # original BERT gelu: x * 0.5 * (1 + erf(x / sqrt(2)))
    return x * 0.5 * (1.0 + _erf_f32(x * jnp.float32(_SQRT_HALF)))


def transf_ffd_kernel(x_ref, w1_ref, b1_ref, w2_ref, b2_ref,
                      lnw_ref, lnb_ref, out_ref):
    x = x_ref[...]                                                  # (TR, H) f32

    # FFD_Intermediate: dense (bf16 MXU operands, f32 accum) + gelu.
    # NOTE: if TILE_R * I grows into the MBs, chunk the gelu over I with an
    # unrolled fori_loop to keep the live f32 temporaries inside 64 vregs.
    h = jnp.dot(x.astype(jnp.bfloat16), w1_ref[...],
                preferred_element_type=jnp.float32) + b1_ref[...]
    h = _gelu_exact(h)                                              # (TR, I) f32

    # FFD_Output: dense + residual + LayerNorm.
    y = jnp.dot(h.astype(jnp.bfloat16), w2_ref[...],
                preferred_element_type=jnp.float32) + b2_ref[...]
    resid = y + x
    mu = jnp.mean(resid, axis=-1, keepdims=True)
    var = jnp.mean((resid - mu) ** 2, axis=-1, keepdims=True)
    normed = (resid - mu) * jax.lax.rsqrt(var + jnp.float32(LAYER_NORM_EPS))
    out_ref[...] = (normed * lnw_ref[...] + lnb_ref[...]).astype(out_ref.dtype)


def _round_up(n, m):
    return ((n + m - 1) // m) * m


def transf_ffd(x, params, *, tile_r=256):
    """x: [B, S, H] f32. Weights pre-transposed: [fan_in, fan_out]."""
    B, S, H = x.shape
    I = params["w1"].shape[1]
    rows = B * S
    x2d = x.reshape(rows, H)                       # free row-major reshape

    # Row tile: multiple of 8 (sublane), capped so tiny inputs stay one step.
    tr = min(tile_r, _round_up(rows, 8))
    rows_p = _round_up(rows, tr)
    if rows_p != rows:
        # Zero rows LayerNorm to 0 and are sliced off below -> harmless.
        x2d = jnp.pad(x2d, ((0, rows_p - rows), (0, 0)))
    grid = (rows_p // tr,)

    # bf16 weights: native MXU dtype on v6e/v7x, half the weight DMA bytes.
    w1 = params["w1"].astype(jnp.bfloat16)
    w2 = params["w2"].astype(jnp.bfloat16)

    flops = 2 * rows_p * H * I * 2                 # two matmuls
    bytes_accessed = (x2d.size * 4 + w1.size * 2 + w2.size * 2 +
                      params["b1"].size * 4 + params["b2"].size * 4 +
                      params["ln_w"].size * 4 + params["ln_b"].size * 4 +
                      rows_p * H * 4)

    row_map = lambda i: (i, 0)                     # tiled along rows
    const_map = lambda i: (0, 0)                   # weights: VMEM-resident

    out2d = pl.pallas_call(
        transf_ffd_kernel,
        out_shape=jax.ShapeDtypeStruct((rows_p, H), jnp.float32),
        grid=grid,
        in_specs=[
            pl.BlockSpec((tr, H), row_map),        # x (double-buffered)
            pl.BlockSpec((H, I), const_map),       # w1 (resident)
            pl.BlockSpec((1, I), const_map),       # b1
            pl.BlockSpec((I, H), const_map),       # w2 (resident)
            pl.BlockSpec((1, H), const_map),       # b2
            pl.BlockSpec((1, H), const_map),       # ln weight
            pl.BlockSpec((1, H), const_map),       # ln bias
        ],
        out_specs=pl.BlockSpec((tr, H), row_map),
        compiler_params=pltpu.CompilerParams(
            dimension_semantics=("parallel",),     # v7x: split rows across TCs
            vmem_limit_bytes=32 << 20),
        cost_estimate=pl.CostEstimate(
            flops=flops,
            transcendentals=rows_p * I,            # one EUP recip per gelu elem
            bytes_accessed=bytes_accessed),
    )(x2d, w1, params["b1"], w2, params["b2"],
      params["ln_w"], params["ln_b"])
    return out2d[:rows].reshape(B, S, H)


def init_params(rng, hidden, intermediate):
    """torch-Linear-like uniform init; weights stored as [fan_in, fan_out]."""
    k1, k2 = jax.random.split(rng)

    def lin(k, fan_in, fan_out):
        kw, kb = jax.random.split(k)
        bound = 1.0 / math.sqrt(fan_in)
        w = jax.random.uniform(kw, (fan_in, fan_out), jnp.float32, -bound, bound)
        b = jax.random.uniform(kb, (1, fan_out), jnp.float32, -bound, bound)
        return w, b

    w1, b1 = lin(k1, hidden, intermediate)
    w2, b2 = lin(k2, intermediate, hidden)
    return {
        "w1": w1, "b1": b1, "w2": w2, "b2": b2,
        "ln_w": jnp.ones((1, hidden), jnp.float32),   # nn.LayerNorm defaults
        "ln_b": jnp.zeros((1, hidden), jnp.float32),
    }


def transf_ffd_ref(x, params):
    """Pure-JAX f32 reference of the PyTorch forward."""
    h = x @ params["w1"] + params["b1"]
    h = h * 0.5 * (1.0 + jax.scipy.special.erf(h / math.sqrt(2.0)))
    y = h @ params["w2"] + params["b2"]
    r = y + x
    mu = r.mean(-1, keepdims=True)
    var = ((r - mu) ** 2).mean(-1, keepdims=True)
    return (r - mu) * jax.lax.rsqrt(var + LAYER_NORM_EPS) * params["ln_w"] + params["ln_b"]


if __name__ == "__main__":
    root = jax.random.PRNGKey(0)
    k_params, k_x = jax.random.split(root)

    params = init_params(k_params, HIDDEN, INTERMEDIATE)
    x = jax.random.normal(k_x, (BATCH, SEQ, HIDDEN), jnp.float32)

    out = transf_ffd(x, params)
    jax.block_until_ready(out)
    assert out.shape == (BATCH, SEQ, HIDDEN)

    ref = transf_ffd_ref(x, params)
    # bf16 MXU operands + approx EUP reciprocal perturb results by O(5e-3).
    max_err = float(jnp.max(jnp.abs(out - ref)))
    assert max_err < 2e-2, f"mismatch vs reference: max abs err = {max_err}"

    print("KERNEL_OK")
</pallas_src>

<mosaic_0001>
module attributes {stable_mosaic.version = 11 : i64} {
  func.func @transf_ffd_kernel(%arg0: i32, %arg1: memref<16x32xf32, #tpu.memory_space<vmem>>, %arg2: memref<32x128xbf16, #tpu.memory_space<vmem>>, %arg3: memref<1x128xf32, #tpu.memory_space<vmem>>, %arg4: memref<128x32xbf16, #tpu.memory_space<vmem>>, %arg5: memref<1x32xf32, #tpu.memory_space<vmem>>, %arg6: memref<1x32xf32, #tpu.memory_space<vmem>>, %arg7: memref<1x32xf32, #tpu.memory_space<vmem>>, %arg8: memref<16x32xf32, #tpu.memory_space<vmem>>) attributes {dimension_semantics = [#tpu.dimension_semantics<parallel>], iteration_bounds = array<i64: 1>, scalar_prefetch = 0 : i64, scratch_operands = 0 : i64, tpu.core_type = #tpu.core_type<tc>, window_params = [{transform_indices = @transform_0, window_bounds = array<i64: 16, 32>}, {pipeline_mode = #tpu.pipeline_mode<synchronous>, transform_indices = @transform_1, window_bounds = array<i64: 32, 128>}, {pipeline_mode = #tpu.pipeline_mode<synchronous>, transform_indices = @transform_2, window_bounds = array<i64: 1, 128>}, {pipeline_mode = #tpu.pipeline_mode<synchronous>, transform_indices = @transform_3, window_bounds = array<i64: 128, 32>}, {pipeline_mode = #tpu.pipeline_mode<synchronous>, transform_indices = @transform_4, window_bounds = array<i64: 1, 32>}, {pipeline_mode = #tpu.pipeline_mode<synchronous>, transform_indices = @transform_5, window_bounds = array<i64: 1, 32>}, {pipeline_mode = #tpu.pipeline_mode<synchronous>, transform_indices = @transform_6, window_bounds = array<i64: 1, 32>}, {transform_indices = @transform_7, window_bounds = array<i64: 16, 32>}]} {
    %c0 = arith.constant 0 : index
    %c0_0 = arith.constant 0 : index
    %0 = vector.load %arg1[%c0, %c0_0] : memref<16x32xf32, #tpu.memory_space<vmem>>, vector<16x32xf32>
    %1 = arith.truncf %0 : vector<16x32xf32> to vector<16x32xbf16>
    %c0_1 = arith.constant 0 : index
    %c0_2 = arith.constant 0 : index
    %2 = vector.load %arg2[%c0_1, %c0_2] : memref<32x128xbf16, #tpu.memory_space<vmem>>, vector<32x128xbf16>
    %cst = arith.constant dense<0.000000e+00> : vector<16x128xf32>
    %3 = tpu.matmul %1, %2, %cst {dimension_numbers = #tpu.dot_dimension_numbers<[1], [0], [0], [1], [0, 0, 1, 1], [], []>} : vector<16x32xbf16>, vector<32x128xbf16>, vector<16x128xf32> -> vector<16x128xf32>
    %c0_3 = arith.constant 0 : index
    %c0_4 = arith.constant 0 : index
    %4 = vector.load %arg3[%c0_3, %c0_4] : memref<1x128xf32, #tpu.memory_space<vmem>>, vector<1x128xf32>
    %5 = vector.broadcast %4 : vector<1x128xf32> to vector<16x128xf32>
    %6 = arith.addf %3, %5 : vector<16x128xf32>
    %cst_5 = arith.constant 5.000000e-01 : f32
    %7 = vector.broadcast %cst_5 : f32 to vector<16x128xf32>
    %8 = arith.mulf %6, %7 : vector<16x128xf32>
    %cst_6 = arith.constant 0.707106769 : f32
    %9 = vector.broadcast %cst_6 : f32 to vector<16x128xf32>
    %10 = arith.mulf %6, %9 : vector<16x128xf32>
    %cst_7 = arith.constant 3.8325069 : f32
    %11 = vector.broadcast %cst_7 : f32 to vector<16x128xf32>
    %12 = arith.minimumf %10, %11 : vector<16x128xf32>
    %cst_8 = arith.constant -3.8325069 : f32
    %13 = vector.broadcast %cst_8 : f32 to vector<16x128xf32>
    %14 = arith.maximumf %12, %13 : vector<16x128xf32>
    %15 = arith.mulf %14, %14 : vector<16x128xf32>
    %cst_9 = arith.constant -2.72614237E-10 : f32
    %16 = vector.broadcast %cst_9 : f32 to vector<16x128xf32>
    %17 = arith.mulf %16, %15 : vector<16x128xf32>
    %cst_10 = arith.constant 2.77068146E-8 : f32
    %18 = vector.broadcast %cst_10 : f32 to vector<16x128xf32>
    %19 = arith.addf %17, %18 : vector<16x128xf32>
    %20 = arith.mulf %19, %15 : vector<16x128xf32>
    %cst_11 = arith.constant -2.10102394E-6 : f32
    %21 = vector.broadcast %cst_11 : f32 to vector<16x128xf32>
    %22 = arith.addf %20, %21 : vector<16x128xf32>
    %23 = arith.mulf %22, %15 : vector<16x128xf32>
    %cst_12 = arith.constant -5.69250624E-5 : f32
    %24 = vector.broadcast %cst_12 : f32 to vector<16x128xf32>
    %25 = arith.addf %23, %24 : vector<16x128xf32>
    %26 = arith.mulf %25, %15 : vector<16x128xf32>
    %cst_13 = arith.constant -7.34990637E-4 : f32
    %27 = vector.broadcast %cst_13 : f32 to vector<16x128xf32>
    %28 = arith.addf %26, %27 : vector<16x128xf32>
    %29 = arith.mulf %28, %15 : vector<16x128xf32>
    %cst_14 = arith.constant -2.954600e-03 : f32
    %30 = vector.broadcast %cst_14 : f32 to vector<16x128xf32>
    %31 = arith.addf %29, %30 : vector<16x128xf32>
    %32 = arith.mulf %31, %15 : vector<16x128xf32>
    %cst_15 = arith.constant -0.0160960332 : f32
    %33 = vector.broadcast %cst_15 : f32 to vector<16x128xf32>
    %34 = arith.addf %32, %33 : vector<16x128xf32>
    %cst_16 = arith.constant -1.45660715E-5 : f32
    %35 = vector.broadcast %cst_16 : f32 to vector<16x128xf32>
    %36 = arith.mulf %35, %15 : vector<16x128xf32>
    %cst_17 = arith.constant -2.13374049E-4 : f32
    %37 = vector.broadcast %cst_17 : f32 to vector<16x128xf32>
    %38 = arith.addf %36, %37 : vector<16x128xf32>
    %39 = arith.mulf %38, %15 : vector<16x128xf32>
    %cst_18 = arith.constant -0.00168282702 : f32
    %40 = vector.broadcast %cst_18 : f32 to vector<16x128xf32>
    %41 = arith.addf %39, %40 : vector<16x128xf32>
    %42 = arith.mulf %41, %15 : vector<16x128xf32>
    %cst_19 = arith.constant -0.00737332925 : f32
    %43 = vector.broadcast %cst_19 : f32 to vector<16x128xf32>
    %44 = arith.addf %42, %43 : vector<16x128xf32>
    %45 = arith.mulf %44, %15 : vector<16x128xf32>
    %cst_20 = arith.constant -0.0142647391 : f32
    %46 = vector.broadcast %cst_20 : f32 to vector<16x128xf32>
    %47 = arith.addf %45, %46 : vector<16x128xf32>
    %48 = arith.mulf %14, %34 : vector<16x128xf32>
    %49 = tpu.reciprocal %47 {approx = true} : vector<16x128xf32> -> vector<16x128xf32>
    %50 = arith.mulf %48, %49 : vector<16x128xf32>
    %cst_21 = arith.constant 1.000000e+00 : f32
    %51 = vector.broadcast %cst_21 : f32 to vector<16x128xf32>
    %52 = arith.addf %51, %50 : vector<16x128xf32>
    %53 = arith.mulf %8, %52 : vector<16x128xf32>
    %54 = arith.truncf %53 : vector<16x128xf32> to vector<16x128xbf16>
    %c0_22 = arith.constant 0 : index
    %c0_23 = arith.constant 0 : index
    %55 = vector.load %arg4[%c0_22, %c0_23] : memref<128x32xbf16, #tpu.memory_space<vmem>>, vector<128x32xbf16>
    %cst_24 = arith.constant dense<0.000000e+00> : vector<16x32xf32>
    %56 = tpu.matmul %54, %55, %cst_24 {dimension_numbers = #tpu.dot_dimension_numbers<[1], [0], [0], [1], [0, 0, 1, 1], [], []>} : vector<16x128xbf16>, vector<128x32xbf16>, vector<16x32xf32> -> vector<16x32xf32>
    %c0_25 = arith.constant 0 : index
    %c0_26 = arith.constant 0 : index
    %57 = vector.load %arg5[%c0_25, %c0_26] : memref<1x32xf32, #tpu.memory_space<vmem>>, vector<1x32xf32>
    %58 = vector.broadcast %57 : vector<1x32xf32> to vector<16x32xf32>
    %59 = arith.addf %56, %58 : vector<16x32xf32>
    %60 = arith.addf %59, %0 : vector<16x32xf32>
    %cst_27 = arith.constant dense<0.000000e+00> : vector<16xf32>
    %61 = vector.multi_reduction <add>, %60, %cst_27 [1] : vector<16x32xf32> to vector<16xf32>
    %62 = vector.shape_cast %61 : vector<16xf32> to vector<16x1xf32>
    %cst_28 = arith.constant 3.200000e+01 : f32
    %63 = vector.broadcast %cst_28 : f32 to vector<16x1xf32>
    %64 = arith.divf %62, %63 : vector<16x1xf32>
    %65 = vector.broadcast %64 : vector<16x1xf32> to vector<16x32xf32>
    %66 = arith.subf %60, %65 : vector<16x32xf32>
    %67 = arith.mulf %66, %66 : vector<16x32xf32>
    %cst_29 = arith.constant dense<0.000000e+00> : vector<16xf32>
    %68 = vector.multi_reduction <add>, %67, %cst_29 [1] : vector<16x32xf32> to vector<16xf32>
    %69 = vector.shape_cast %68 : vector<16xf32> to vector<16x1xf32>
    %cst_30 = arith.constant 3.200000e+01 : f32
    %70 = vector.broadcast %cst_30 : f32 to vector<16x1xf32>
    %71 = arith.divf %69, %70 : vector<16x1xf32>
    %72 = vector.broadcast %64 : vector<16x1xf32> to vector<16x32xf32>
    %73 = arith.subf %60, %72 : vector<16x32xf32>
    %cst_31 = arith.constant 9.99999996E-13 : f32
    %74 = vector.broadcast %cst_31 : f32 to vector<16x1xf32>
    %75 = arith.addf %71, %74 : vector<16x1xf32>
    %76 = math.rsqrt %75 : vector<16x1xf32>
    %77 = vector.broadcast %76 : vector<16x1xf32> to vector<16x32xf32>
    %78 = arith.mulf %73, %77 : vector<16x32xf32>
    %c0_32 = arith.constant 0 : index
    %c0_33 = arith.constant 0 : index
    %79 = vector.load %arg6[%c0_32, %c0_33] : memref<1x32xf32, #tpu.memory_space<vmem>>, vector<1x32xf32>
    %80 = vector.broadcast %79 : vector<1x32xf32> to vector<16x32xf32>
    %81 = arith.mulf %78, %80 : vector<16x32xf32>
    %c0_34 = arith.constant 0 : index
    %c0_35 = arith.constant 0 : index
    %82 = vector.load %arg7[%c0_34, %c0_35] : memref<1x32xf32, #tpu.memory_space<vmem>>, vector<1x32xf32>
    %83 = vector.broadcast %82 : vector<1x32xf32> to vector<16x32xf32>
    %84 = arith.addf %81, %83 : vector<16x32xf32>
    %c0_36 = arith.constant 0 : index
    %c0_37 = arith.constant 0 : index
    %85 = vector.load %arg8[%c0_36, %c0_37] : memref<16x32xf32, #tpu.memory_space<vmem>>, vector<16x32xf32>
    tpu.vector_store %arg8[%c0_36, %c0_37], %84 {strides = array<i32>} : memref<16x32xf32, #tpu.memory_space<vmem>>, vector<16x32xf32>,
    return
  }
  func.func @transform_0(%arg0: i32) -> (i32, i32) {
    %c0_i32 = arith.constant 0 : i32
    %c0_i32_0 = arith.constant 0 : i32
    return %arg0, %c0_i32 : i32, i32
  }
  func.func @transform_1(%arg0: i32) -> (i32, i32) {
    %c0_i32 = arith.constant 0 : i32
    %c0_i32_0 = arith.constant 0 : i32
    %c0_i32_1 = arith.constant 0 : i32
    return %c0_i32, %c0_i32_0 : i32, i32
  }
  func.func @transform_2(%arg0: i32) -> (i32, i32) {
    %c0_i32 = arith.constant 0 : i32
    %c0_i32_0 = arith.constant 0 : i32
    %c0_i32_1 = arith.constant 0 : i32
    return %c0_i32, %c0_i32_0 : i32, i32
  }
  func.func @transform_3(%arg0: i32) -> (i32, i32) {
    %c0_i32 = arith.constant 0 : i32
    %c0_i32_0 = arith.constant 0 : i32
    %c0_i32_1 = arith.constant 0 : i32
    return %c0_i32, %c0_i32_0 : i32, i32
  }
  func.func @transform_4(%arg0: i32) -> (i32, i32) {
    %c0_i32 = arith.constant 0 : i32
    %c0_i32_0 = arith.constant 0 : i32
    %c0_i32_1 = arith.constant 0 : i32
    return %c0_i32, %c0_i32_0 : i32, i32
  }
  func.func @transform_5(%arg0: i32) -> (i32, i32) {
    %c0_i32 = arith.constant 0 : i32
    %c0_i32_0 = arith.constant 0 : i32
    %c0_i32_1 = arith.constant 0 : i32
    return %c0_i32, %c0_i32_0 : i32, i32
  }
  func.func @transform_6(%arg0: i32) -> (i32, i32) {
    %c0_i32 = arith.constant 0 : i32
    %c0_i32_0 = arith.constant 0 : i32
    %c0_i32_1 = arith.constant 0 : i32
    return %c0_i32, %c0_i32_0 : i32, i32
  }
  func.func @transform_7(%arg0: i32) -> (i32, i32) {
    %c0_i32 = arith.constant 0 : i32
    %c0_i32_0 = arith.constant 0 : i32
    return %arg0, %c0_i32 : i32, i32
  }
}

</mosaic_0001>

<llo_original>
// kernel: tpu_custom_call.1
$region0: #{tpu_custom_call.1}
  #allocation0 [shape = 'u32[]', space=smem, size = 0x4, offset = 0x4, fixed_abs, tag = 'smem constant byte address 0x4 - core index']
  #allocation1 [shape = 'u32[72,128]{1,0:T(1,128)}', space=vmem, size = 0x9000, scoped, tag = 'internal scratch']
  %s0 = inlined_call_operand.vmem [shape: f32[16,32], index: 0, kind: input, shape index: {}]
  %s1 = inlined_call_operand.vmem [shape: bf16[32,128], index: 1, kind: input, shape index: {}]
  %s2 = inlined_call_operand.vmem [shape: f32[1,128], index: 2, kind: input, shape index: {}]
  %s3 = inlined_call_operand.vmem [shape: bf16[128,32], index: 3, kind: input, shape index: {}]
  %s4 = inlined_call_operand.vmem [shape: f32[1,32], index: 4, kind: input, shape index: {}]
  %s5 = inlined_call_operand.vmem [shape: f32[1,32], index: 5, kind: input, shape index: {}]
  %s6 = inlined_call_operand.vmem [shape: f32[1,32], index: 6, kind: input, shape index: {}]
  %s7 = inlined_call_operand.hbm [shape: f32[16,32], index: 7, kind: output, shape index: {}]
  %s8 = sld [smem:[#allocation0]]
  $region38: #{tpu_custom_call.1} parent=0
    _
  %s10 = ssub.s32 1, %s8
  %s11 = scalar_select 0, %s10, %s8
  $region1: #{tpu_custom_call.1} parent=0
    #allocation2 [shape = 'u8[8192]{0}', space=vmem, size = 0x2000, scoped, tag = 'output window, operand 0, single buffered']
    #allocation3 [shape = 's32[1]{0}', space=sflag, size = 0x4, scoped, tag = 'scoped memory for tpu_custom_call.1']
    %12 = vsyncpa [#allocation3], 0
    // Predicated region
    $region2: #{tpu_custom_call.1} parent=1 // pred_check
      _
    $region3: #{tpu_custom_call.1} parent=1 // pred_check_branch
      %14 = sbr.rel (0) target = $region5
    $region4: #{tpu_custom_call.1} parent=1 // pred_region
      _
    $region5: #{tpu_custom_call.1} parent=1 // pred_fallthru
      _
    // Predicated region
    $region6: #{tpu_custom_call.1} parent=1 // pred_check
      _
    $region7: #{tpu_custom_call.1} parent=1 // pred_check_branch
      %16 = sbr.rel (0) target = $region9
    $region8: #{tpu_custom_call.1} parent=1 // pred_region
      _
    $region9: #{tpu_custom_call.1} parent=1 // pred_fallthru
      _
    // Predicated region
    $region10: #{tpu_custom_call.1} parent=1 // pred_check
      _
    $region11: #{tpu_custom_call.1} parent=1 // pred_check_branch
      %18 = sbr.rel (0) target = $region13
    $region12: #{tpu_custom_call.1} parent=1 // pred_region
      _
    $region13: #{tpu_custom_call.1} parent=1 // pred_fallthru
      _
    // Predicated region
    $region14: #{tpu_custom_call.1} parent=1 // pred_check
      _
    $region15: #{tpu_custom_call.1} parent=1 // pred_check_branch
      %20 = sbr.rel (0) target = $region17
    $region16: #{tpu_custom_call.1} parent=1 // pred_region
      _
    $region17: #{tpu_custom_call.1} parent=1 // pred_fallthru
      _
    // Predicated region
    $region18: #{tpu_custom_call.1} parent=1 // pred_check
      _
    $region19: #{tpu_custom_call.1} parent=1 // pred_check_branch
      %22 = sbr.rel (0) target = $region21
    $region20: #{tpu_custom_call.1} parent=1 // pred_region
      _
    $region21: #{tpu_custom_call.1} parent=1 // pred_fallthru
      _
    // Predicated region
    $region22: #{tpu_custom_call.1} parent=1 // pred_check
      _
    $region23: #{tpu_custom_call.1} parent=1 // pred_check_branch
      %24 = sbr.rel (0) target = $region25
    $region24: #{tpu_custom_call.1} parent=1 // pred_region
      _
    $region25: #{tpu_custom_call.1} parent=1 // pred_fallthru
      _
    // Predicated region
    $region26: #{tpu_custom_call.1} parent=1 // pred_check
      _
    $region27: #{tpu_custom_call.1} parent=1 // pred_check_branch
      %26 = sbr.rel (0) target = $region29
    $region28: #{tpu_custom_call.1} parent=1 // pred_region
      _
    $region29: #{tpu_custom_call.1} parent=1 // pred_fallthru
      _
    %v28 = vld [vmem:[%s0] sm:$0xff]
    %v29 = vld [vmem:[%s0 + $0x8] sm:$0xff]
    %v30 = vpack.c.bf16 %v29, %v28
    %v31 = vld [vmem:[%s1] sm:$0xf]
    %v32 = vld [vmem:[%s1 + $0x4] sm:$0xf]
    %v33 = vld [vmem:[%s1 + $0x8] sm:$0xf]
    %v34 = vld [vmem:[%s1 + $0xc] sm:$0xf]
    %v35 = vld [vmem:[%s2] sm:$0x1]
    %v37 = vperm.slane %v35, 0
    %v43 = vunpack.c.l.b16 %v31
    %v44 = vunpack.c.l.b16 %v32
    %v45 = vunpack.c.l.b16 %v33
    %v46 = vunpack.c.l.b16 %v34
    %v47 = vpack.c.b16 %v44, %v43
    %v48 = vpack.c.b16 %v46, %v45
    %vm51 = vcmask 261120
    %v53 = vsel %vm51, %v30, 0
    %55 = vmatpush.bf16.msra.mxu0 0
    %56 = vmatpush.bf16.msra.mxu0 0
    %57 = vmatpush.bf16.msra.mxu0 0
    %58 = vmatpush.bf16.msra.mxu0 0
    %59 = vmatpush.bf16.msra.mxu0 0
    %60 = vmatpush.bf16.msra.mxu0 0
    %61 = vmatpush.bf16.msra.mxu0 %v48
    %62 = vmatpush.bf16.msra.mxu0 %v47
    %63 = vmatmul.bf16.gmra.mxu0 %v53
    %v64 = vpop.f32.mrf.mxu0
    %v65 = vadd.f32 %v37, %v64
    %v66 = vpop.f32.mrf.mxu0
    %v67 = vadd.f32 %v37, %v66
    %68 = vdwg.mxu0
    %v69 = vmul.f32 %v65, 0.5
    %v70 = vmul.f32 %v67, 0.5
    %v71 = vmul.f32 %v65, 0.70710677
    %v72 = vmul.f32 %v67, 0.70710677
    %v73 = vmin.f32 %v71, 3.832507
    %v74 = vmin.f32 %v72, 3.832507
    %v75 = vmax.f32 %v73, -3.832507
    %v76 = vmax.f32 %v74, -3.832507
    %v77 = vmul.f32 %v75, %v75
    %v78 = vmul.f32 %v76, %v76
    %v79 = vmul.f32 %v77, -2.7261424e-10
    %v80 = vmul.f32 %v78, -2.7261424e-10
    %v81 = vadd.f32 %v79, 2.7706815e-08
    %v82 = vadd.f32 %v80, 2.7706815e-08
    %v83 = vmul.f32 %v81, %v77
    %v84 = vmul.f32 %v82, %v78
    %v85 = vadd.f32 %v83, -2.101024e-06
    %v86 = vadd.f32 %v84, -2.101024e-06
    %v87 = vmul.f32 %v85, %v77
    %v88 = vmul.f32 %v86, %v78
    %v89 = vadd.f32 %v87, -5.6925062e-05
    %v90 = vadd.f32 %v88, -5.6925062e-05
    %v91 = vmul.f32 %v89, %v77
    %v92 = vmul.f32 %v90, %v78
    %v93 = vadd.f32 %v91, -0.00073499064
    %v94 = vadd.f32 %v92, -0.00073499064
    %v95 = vmul.f32 %v93, %v77
    %v96 = vmul.f32 %v94, %v78
    %v97 = vadd.f32 %v95, -0.0029546
    %v98 = vadd.f32 %v96, -0.0029546
    %v99 = vmul.f32 %v97, %v77
    %v100 = vmul.f32 %v98, %v78
    %v101 = vadd.f32 %v99, -0.016096033
    %v102 = vadd.f32 %v100, -0.016096033
    %v103 = vmul.f32 %v77, -1.45660715e-05
    %v104 = vmul.f32 %v78, -1.45660715e-05
    %v105 = vadd.f32 %v103, -0.00021337405
    %v106 = vadd.f32 %v104, -0.00021337405
    %v107 = vmul.f32 %v105, %v77
    %v108 = vmul.f32 %v106, %v78
    %v109 = vadd.f32 %v107, -0.001682827
    %v110 = vadd.f32 %v108, -0.001682827
    %v111 = vmul.f32 %v109, %v77
    %v112 = vmul.f32 %v110, %v78
    %v113 = vadd.f32 %v111, -0.0073733293
    %v114 = vadd.f32 %v112, -0.0073733293
    %v115 = vmul.f32 %v113, %v77
    %v116 = vmul.f32 %v114, %v78
    %v117 = vadd.f32 %v115, -0.014264739
    %v118 = vadd.f32 %v116, -0.014264739
    %v119 = vmul.f32 %v75, %v101
    %v120 = vmul.f32 %v76, %v102
    %v121 = vrcp.pop %v117
    %v122 = vrcp.pop %v118
    %v123 = vmul.f32 %v119, %v121
    %v124 = vmul.f32 %v120, %v122
    %v125 = vadd.f32 %v123, 1.0
    %v126 = vadd.f32 %v124, 1.0
    %v127 = vmul.f32 %v69, %v125
    %v128 = vmul.f32 %v70, %v126
    %v129 = vpack.c.bf16 %v128, %v127
    %v130 = vld [vmem:[%s3] sm:$0xf]
    %v131 = vld [vmem:[%s3 + $0x4] sm:$0xf]
    %v132 = vld [vmem:[%s3 + $0x8] sm:$0xf]
    %v133 = vld [vmem:[%s3 + $0xc] sm:$0xf]
    %v134 = vld [vmem:[%s3 + $0x10] sm:$0xf]
    %v135 = vld [vmem:[%s3 + $0x14] sm:$0xf]
    %v136 = vld [vmem:[%s3 + $0x18] sm:$0xf]
    %v137 = vld [vmem:[%s3 + $0x1c] sm:$0xf]
    %v138 = vld [vmem:[%s3 + $0x20] sm:$0xf]
    %v139 = vld [vmem:[%s3 + $0x24] sm:$0xf]
    %v140 = vld [vmem:[%s3 + $0x28] sm:$0xf]
    %v141 = vld [vmem:[%s3 + $0x2c] sm:$0xf]
    %v142 = vld [vmem:[%s3 + $0x30] sm:$0xf]
    %v143 = vld [vmem:[%s3 + $0x34] sm:$0xf]
    %v144 = vld [vmem:[%s3 + $0x38] sm:$0xf]
    %v145 = vld [vmem:[%s3 + $0x3c] sm:$0xf]
    %v146 = vld [vmem:[%s4] sm:$0x1]
    %v148 = vperm.slane %v146, 0
    %v166 = vunpack.c.l.b16 %v130
    %v167 = vunpack.c.l.b16 %v131
    %v168 = vunpack.c.l.b16 %v132
    %v169 = vunpack.c.l.b16 %v133
    %v170 = vunpack.c.l.b16 %v134
    %v171 = vunpack.c.l.b16 %v135
    %v172 = vunpack.c.l.b16 %v136
    %v173 = vunpack.c.l.b16 %v137
    %v174 = vunpack.c.l.b16 %v138
    %v175 = vunpack.c.l.b16 %v139
    %v176 = vunpack.c.l.b16 %v140
    %v177 = vunpack.c.l.b16 %v141
    %v178 = vunpack.c.l.b16 %v142
    %v179 = vunpack.c.l.b16 %v143
    %v180 = vunpack.c.l.b16 %v144
    %v181 = vunpack.c.l.b16 %v145
    %v182 = vpack.c.b16 %v167, %v166
    %v183 = vpack.c.b16 %v169, %v168
    %v184 = vpack.c.b16 %v171, %v170
    %v185 = vpack.c.b16 %v173, %v172
    %v186 = vpack.c.b16 %v175, %v174
    %v187 = vpack.c.b16 %v177, %v176
    %v188 = vpack.c.b16 %v179, %v178
    %v189 = vpack.c.b16 %v181, %v180
    %198 = vmatpush.bf16.msra.mxu0 %v189
    %199 = vmatpush.bf16.msra.mxu0 %v188
    %200 = vmatpush.bf16.msra.mxu0 %v187
    %201 = vmatpush.bf16.msra.mxu0 %v186
    %202 = vmatpush.bf16.msra.mxu0 %v185
    %203 = vmatpush.bf16.msra.mxu0 %v184
    %204 = vmatpush.bf16.msra.mxu0 %v183
    %205 = vmatpush.bf16.msra.mxu0 %v182
    %206 = vmatmul.bf16.gmra.mxu0 %v129
    %v207 = vpop.f32.mrf.mxu0
    %v208 = vadd.f32 %v148, %v207
    %v209 = vpop.f32.mrf.mxu0
    %v210 = vadd.f32 %v148, %v209
    %211 = vdwg.mxu0
    %v212 = vadd.f32 %v208, %v28
    %v213 = vadd.f32 %v210, %v29
    %v214 = vsel %vm51, %v212, 0.0
    %215 = vadd.xlane.f32.xlu0 %v214
    %v216 = vpop.xlane.xlu0 %215
    %v217 = vsel %vm51, %v213, 0.0
    %218 = vadd.xlane.f32.xlu0 %v217
    %v219 = vpop.xlane.xlu0 %218
    %v220 = vrcp.pop 32.0
    %v221 = vmul.f32 32.0, %v220
    %v222 = vsub.f32 1.0, %v221
    %v223 = vmul.f32 %v220, %v222
    %v224 = vadd.f32 %v220, %v223
    %vm225 = vweird.f32 %v220
    %v226 = vsel %vm225, %v220, %v224
    %v227 = vmul.f32 %v216, %v226
    %v228 = vmul.f32 %v219, %v226
    %v229 = vsub.f32 %v212, %v227
    %v230 = vsub.f32 %v213, %v228
    %v231 = vmul.f32 %v229, %v229
    %v232 = vmul.f32 %v230, %v230
    %v233 = vsel %vm51, %v231, 0.0
    %234 = vadd.xlane.f32.xlu0 %v233
    %v235 = vpop.xlane.xlu0 %234
    %v236 = vsel %vm51, %v232, 0.0
    %237 = vadd.xlane.f32.xlu0 %v236
    %v238 = vpop.xlane.xlu0 %237
    %v239 = vmul.f32 %v235, %v226
    %v240 = vmul.f32 %v238, %v226
    %v241 = vadd.f32 %v239, 1e-12
    %v242 = vadd.f32 %v240, 1e-12
    %v243 = vrsqrt.pop %v241
    %v244 = vmul.f32 %v243, %v241
    %v245 = vmul.f32 %v244, %v243
    %v246 = vmul.f32 0.5, %v245
    %v247 = vsub.f32 1.5, %v246
    %v248 = vmul.f32 %v243, %v247
    %vm249 = vweird.f32 %v241
    %vm250 = vweird.f32 %v243
    %vm251 = vmor %vm249, %vm250
    %v252 = vsel %vm251, %v243, %v248
    %v253 = vrsqrt.pop %v242
    %v254 = vmul.f32 %v253, %v242
    %v255 = vmul.f32 %v254, %v253
    %v256 = vmul.f32 0.5, %v255
    %v257 = vsub.f32 1.5, %v256
    %v258 = vmul.f32 %v253, %v257
    %vm259 = vweird.f32 %v242
    %vm260 = vweird.f32 %v253
    %vm261 = vmor %vm259, %vm260
    %v262 = vsel %vm261, %v253, %v258
    %v263 = vmul.f32 %v229, %v252
    %v264 = vmul.f32 %v230, %v262
    %v265 = vld [vmem:[%s5] sm:$0x1]
    %v267 = vperm.slane %v265, 0
    %v269 = vmul.f32 %v263, %v267
    %v270 = vmul.f32 %v264, %v267
    %v271 = vld [vmem:[%s6] sm:$0x1]
    %v273 = vperm.slane %v271, 0
    %v275 = vadd.f32 %v269, %v273
    %v276 = vadd.f32 %v270, %v273
    %277 = vst.msk [vmem:[#allocation2] sm:$0xff] %vm51, %v275
    %278 = vst.msk [vmem:[#allocation2 + $0x8] sm:$0xff] %vm51, %v276
    // Predicated region
    $region30: #{tpu_custom_call.1} parent=1 // pred_check
      _
    $region31: #{tpu_custom_call.1} parent=1 // pred_check_branch
      %280 = sbr.rel (0) target = $region33
    $region32: #{tpu_custom_call.1} parent=1 // pred_region
      %282 = vsyncadd [#allocation3], 0
      %s283 = sshll.u32 [#allocation2], 4
      %s284 = int_to_ptr.vmem [resolvable:$true] %s283
      %s285 = sshll.u32 %s7, 4
      %s286 = int_to_ptr.hbm [resolvable:$true] %s285
      %291 = dma.vmem_to_hbm [thread:$0]  %s284, 256, %s286, [#allocation3], 128, 128, 8
    $region33: #{tpu_custom_call.1} parent=1 // pred_fallthru
      _
    // Predicated region
    $region34: #{tpu_custom_call.1} parent=1 // pred_check
      _
    $region35: #{tpu_custom_call.1} parent=1 // pred_check_branch
      %293 = sbr.rel (0) target = $region37
    $region36: #{tpu_custom_call.1} parent=1 // pred_region
      %295 = dma.done [#allocation3], 256
    $region37: #{tpu_custom_call.1} parent=1 // pred_fallthru
      _
    %296 = vsyncpa [#allocation3], 1

</llo_original>
